<compile_context>
chip_gen: v7x
topology: tpu7x:2x2x1
jax: 0.10.0
libtpu: 0.0.40
codegen_flags: <defaults>
</compile_context>

<pallas_src>
import functools

import jax
import jax.numpy as jnp
from jax.experimental import pallas as pl
from jax.experimental.pallas import tpu as pltpu

LANES = 128
SUBLANES = 8
NUM_CORES = 2          # v7x megacore split; extra size-2 axis is harmless on 1-TC chips
MAX_ROW_TILE = 1024    # node rows per grid step


# ----------------------------- small helpers -------------------------------- #
def _cdiv(a, b):
    return -(-a // b)


def _vmem_limit_bytes():
    # 64 MiB scoped limit on 128-MiB parts (v5e/v6e); half of physical on v7x.
    try:
        cap = int(pltpu.get_tpu_info().vmem_capacity_bytes)
    except Exception:
        cap = 128 * 1024 * 1024
    return int(min(64 * 1024 * 1024, cap // 2))


def _compiler_params():
    return pltpu.CompilerParams(
        dimension_semantics=("parallel", "arbitrary"),
        vmem_limit_bytes=_vmem_limit_bytes())


def _as_kernel_dtype(x):
    # f32 / bf16 stream straight into the kernel (upcast happens in VMEM);
    # anything else is cast once in the wrapper.
    if x.dtype == jnp.float32 or x.dtype == jnp.bfloat16:
        return x
    return x.astype(jnp.float32)


def _mask_stream(mask, n):
    m2d = jnp.reshape(mask, (n, 1))
    if jnp.issubdtype(m2d.dtype, jnp.floating):
        return _as_kernel_dtype(m2d)        # fractional masks keep exact values
    return m2d.astype(jnp.int8)             # bool / int masks: 4x smaller HBM stream


def _tiling(n, max_rows):
    """Row tile, #row blocks, #cores used and steps-per-core for n node rows."""
    if n <= max_rows:
        tm = n                                # full-height block: always a legal shape
    else:
        tm = max(32, (max_rows // 32) * 32)   # multiple of 32: legal for f32/bf16/int8
    n_blocks = _cdiv(n, tm)
    cores = NUM_CORES if n_blocks >= NUM_CORES else 1
    steps = _cdiv(n_blocks, cores)
    return tm, n_blocks, cores, steps


def _row_map(steps, n_blocks):
    last = n_blocks - 1

    def index_map(c, i):
        # Clamp duplicate trailing steps (odd n_blocks split over 2 cores) onto a
        # valid block; their contribution is zeroed by the in-kernel validity mask.
        return (jnp.minimum(c * steps + i, last), 0)

    return index_map


def _out_map(c, i):
    return (c, 0, 0)


def _partial_out(cores):
    shape = jax.ShapeDtypeStruct((cores, SUBLANES, LANES), jnp.float32)
    spec = pl.BlockSpec((1, SUBLANES, LANES), _out_map)
    return shape, spec


def _combine(partials):
    return jnp.sum(partials[:, 0, 0])


# ----------------------------- in-kernel helpers ---------------------------- #
def _valid_rows(tm, n_valid):
    """(tm, 1) bool: which rows of the current block are real rows of the input."""
    c = pl.program_id(0)
    i = pl.program_id(1)
    row0 = (c * pl.num_programs(1) + i) * tm
    rows = jax.lax.broadcasted_iota(jnp.int32, (tm, 1), 0) + row0
    return rows < n_valid


def _row_sumsq(a_ref, b_ref, valid):
    d = a_ref[...].astype(jnp.float32) - b_ref[...].astype(jnp.float32)
    return jnp.sum(jnp.where(valid, d * d, 0.0), axis=1, keepdims=True)


def _ce_rows(e_ref, d_ref, valid):
    """Per-row CrossEntropy(dec, argmax(embed)) = lse(dec) - dec[argmax(embed)]."""
    e = jnp.where(valid, e_ref[...].astype(jnp.float32), 0.0)
    dc = jnp.where(valid, d_ref[...].astype(jnp.float32), 0.0)
    n_cls = e.shape[1]
    col = jax.lax.broadcasted_iota(jnp.int32, e.shape, 1)
    e_max = jnp.max(e, axis=1, keepdims=True)
    # first-occurrence argmax (matches torch tie-breaking)
    idx = jnp.min(jnp.where(e == e_max, col, n_cls), axis=1, keepdims=True)
    d_at_tgt = jnp.sum(jnp.where(col == idx, dc, 0.0), axis=1, keepdims=True)
    d_max = jnp.max(dc, axis=1, keepdims=True)
    lse = d_max + jnp.log(jnp.sum(jnp.exp(dc - d_max), axis=1, keepdims=True))
    return jnp.where(valid, lse - d_at_tgt, 0.0)   # (tm, 1)


def _finalize(o_ref, acc_ref):
    # Broadcast the per-core partial sum over the whole (1, 8, 128) output block;
    # the wrapper reads element [c, 0, 0] of each core's block.
    o_ref[...] = jnp.full(o_ref.shape, jnp.sum(acc_ref[...]), jnp.float32)


# --------------------------------- kernels ---------------------------------- #
def _mse_kernel(dec_ref, emb_ref, ro_ref, ra_ref, o_rec, o_inv,
                acc_rec, acc_inv, *, tm, n_valid):
    i = pl.program_id(1)

    @pl.when(i == 0)
    def _():
        acc_rec[...] = jnp.zeros_like(acc_rec)
        acc_inv[...] = jnp.zeros_like(acc_inv)

    valid = _valid_rows(tm, n_valid)
    acc_rec[...] += _row_sumsq(dec_ref, emb_ref, valid)
    acc_inv[...] += _row_sumsq(ro_ref, ra_ref, valid)

    @pl.when(i == pl.num_programs(1) - 1)
    def _():
        _finalize(o_rec, acc_rec)
        _finalize(o_inv, acc_inv)


def _ce_kernel(emb_ref, dec_ref, ro_ref, ra_ref, o_rec, o_inv,
               acc_rec, acc_inv, *, tm, n_valid):
    i = pl.program_id(1)

    @pl.when(i == 0)
    def _():
        acc_rec[...] = jnp.zeros_like(acc_rec)
        acc_inv[...] = jnp.zeros_like(acc_inv)

    valid = _valid_rows(tm, n_valid)
    acc_rec[...] += _ce_rows(emb_ref, dec_ref, valid)
    acc_inv[...] += _row_sumsq(ro_ref, ra_ref, valid)

    @pl.when(i == pl.num_programs(1) - 1)
    def _():
        _finalize(o_rec, acc_rec)
        _finalize(o_inv, acc_inv)


def _ce2_kernel(emb_ref, dec_ref, ro_ref, ra_ref, m_ref, o_rec, o_inv,
                acc_rec, acc_kl, *, tm, n_valid):
    i = pl.program_id(1)

    @pl.when(i == 0)
    def _():
        acc_rec[...] = jnp.zeros_like(acc_rec)
        acc_kl[...] = jnp.zeros_like(acc_kl)

    valid = _valid_rows(tm, n_valid)
    acc_rec[...] += _ce_rows(emb_ref, dec_ref, valid)

    x = ro_ref[...].astype(jnp.float32)      # "input" (expected log-probs in KLDivLoss)
    t = ra_ref[...].astype(jnp.float32)      # "target" probabilities
    safe_t = jnp.where(t > 0, t, 1.0)
    kl = jnp.where(jnp.logical_and(valid, t > 0),
                   t * (jnp.log(safe_t) - x), 0.0)
    m = jnp.where(valid, m_ref[...].astype(jnp.float32), 0.0)   # (tm, 1) row mask
    acc_kl[...] += jnp.sum(kl, axis=1, keepdims=True) * m

    @pl.when(i == pl.num_programs(1) - 1)
    def _():
        _finalize(o_rec, acc_rec)
        _finalize(o_inv, acc_kl)


# --------------------------------- wrappers ---------------------------------- #
def _mse_sums(dec, embed, rep_o, rep_a, max_rows):
    n, c = dec.shape
    d = rep_o.shape[1]
    tm, n_blocks, cores, steps = _tiling(n, max_rows)
    imap = _row_map(steps, n_blocks)
    out_shape, out_spec = _partial_out(cores)
    cost = pl.CostEstimate(flops=int(4 * n * (c + d)), transcendentals=0,
                           bytes_accessed=int(8 * n * (c + d)))
    rec_p, inv_p = pl.pallas_call(
        functools.partial(_mse_kernel, tm=tm, n_valid=n),
        out_shape=(out_shape, out_shape),
        grid=(cores, steps),
        in_specs=[pl.BlockSpec((tm, c), imap),
                  pl.BlockSpec((tm, c), imap),
                  pl.BlockSpec((tm, d), imap),
                  pl.BlockSpec((tm, d), imap)],
        out_specs=(out_spec, out_spec),
        scratch_shapes=[pltpu.VMEM((tm, 1), jnp.float32),
                        pltpu.VMEM((tm, 1), jnp.float32)],
        compiler_params=_compiler_params(),
        cost_estimate=cost,
    )(dec, embed, rep_o, rep_a)
    return _combine(rec_p), _combine(inv_p)


def _ce_sums(embed, dec, rep_o, rep_a, max_rows):
    n, c = embed.shape
    d = rep_o.shape[1]
    tm, n_blocks, cores, steps = _tiling(n, max_rows)
    imap = _row_map(steps, n_blocks)
    out_shape, out_spec = _partial_out(cores)
    cost = pl.CostEstimate(flops=int(10 * n * c + 3 * n * d),
                           transcendentals=int(n * (c + 1)),
                           bytes_accessed=int(8 * n * (c + d)))
    rec_p, inv_p = pl.pallas_call(
        functools.partial(_ce_kernel, tm=tm, n_valid=n),
        out_shape=(out_shape, out_shape),
        grid=(cores, steps),
        in_specs=[pl.BlockSpec((tm, c), imap),
                  pl.BlockSpec((tm, c), imap),
                  pl.BlockSpec((tm, d), imap),
                  pl.BlockSpec((tm, d), imap)],
        out_specs=(out_spec, out_spec),
        scratch_shapes=[pltpu.VMEM((tm, 1), jnp.float32),
                        pltpu.VMEM((tm, 1), jnp.float32)],
        compiler_params=_compiler_params(),
        cost_estimate=cost,
    )(embed, dec, rep_o, rep_a)
    return _combine(rec_p), _combine(inv_p)


def _ce2_sums(embed, dec, rep_o, rep_a, m2d, max_rows):
    n, c = embed.shape
    d = rep_o.shape[1]
    tm, n_blocks, cores, steps = _tiling(n, max_rows)
    imap = _row_map(steps, n_blocks)
    out_shape, out_spec = _partial_out(cores)
    cost = pl.CostEstimate(flops=int(10 * n * c + 6 * n * d),
                           transcendentals=int(n * (c + 1 + d)),
                           bytes_accessed=int(8 * n * (c + d) + 4 * n))
    rec_p, kl_p = pl.pallas_call(
        functools.partial(_ce2_kernel, tm=tm, n_valid=n),
        out_shape=(out_shape, out_shape),
        grid=(cores, steps),
        in_specs=[pl.BlockSpec((tm, c), imap),
                  pl.BlockSpec((tm, c), imap),
                  pl.BlockSpec((tm, d), imap),
                  pl.BlockSpec((tm, d), imap),
                  pl.BlockSpec((tm, 1), imap)],
        out_specs=(out_spec, out_spec),
        scratch_shapes=[pltpu.VMEM((tm, 1), jnp.float32),
                        pltpu.VMEM((tm, 1), jnp.float32)],
        compiler_params=_compiler_params(),
        cost_estimate=cost,
    )(embed, dec, rep_o, rep_a, m2d)
    return _combine(rec_p), _combine(kl_p)


def lagraph_loss(embed_orig, rep_orig, dec_orig, rep_aug, mask, loss, alpha,
                 num_features, max_rows=MAX_ROW_TILE):
    """JAX/Pallas equivalent of LaGraphLoss.forward."""
    n, c = embed_orig.shape
    d = rep_orig.shape[1]
    embed_orig = _as_kernel_dtype(embed_orig)
    dec_orig = _as_kernel_dtype(dec_orig)
    rep_orig = _as_kernel_dtype(rep_orig)
    rep_aug = _as_kernel_dtype(rep_aug)

    if loss == 'mse':
        rec_sum, inv_sum = _mse_sums(dec_orig, embed_orig, rep_orig, rep_aug, max_rows)
        loss_rec = rec_sum / (n * c)
        loss_inv_masked = jnp.sqrt(inv_sum / (n * d))
    elif loss == 'ce':
        rec_sum, inv_sum = _ce_sums(embed_orig, dec_orig, rep_orig, rep_aug, max_rows)
        loss_rec = rec_sum / n
        loss_inv_masked = jnp.sqrt(inv_sum / (n * d))
    elif loss == 'ce2':
        rec_sum, kl_sum = _ce2_sums(embed_orig, dec_orig, rep_orig, rep_aug,
                                    _mask_stream(mask, n), max_rows)
        nf = max(int(num_features), 2)
        scale = jnp.sqrt(jnp.float32(2.0 * (nf - 1) / nf))
        den = jnp.maximum(jnp.sum(mask.astype(jnp.float32)), 1.0)
        loss_rec = rec_sum / n
        loss_inv_masked = scale * (kl_sum / d) / den
    else:
        raise ValueError(f"unknown loss '{loss}'")

    total = loss_rec + alpha * loss_inv_masked
    return total, loss_rec, loss_inv_masked


# --------------------------------- reference --------------------------------- #
def _ref(embed, rep_o, dec, rep_a, mask, loss, alpha, num_features):
    n = embed.shape[0]
    m = mask.astype(jnp.float32)
    if loss == 'mse':
        rec = jnp.mean((dec - embed) ** 2)
        inv = jnp.sqrt(jnp.mean((rep_o - rep_a) ** 2))
    else:
        tgt = jnp.argmax(embed, axis=1)
        logp = jax.nn.log_softmax(dec, axis=1)
        rec = -jnp.mean(logp[jnp.arange(n), tgt])
        if loss == 'ce':
            inv = jnp.sqrt(jnp.mean((rep_o - rep_a) ** 2))
        else:
            nf = max(int(num_features), 2)
            kl = jnp.where(rep_a > 0,
                           rep_a * (jnp.log(jnp.where(rep_a > 0, rep_a, 1.0)) - rep_o),
                           0.0)
            inv = (jnp.sqrt(2.0 * (nf - 1) / nf)
                   * jnp.sum(jnp.mean(kl, axis=1) * m)
                   / jnp.maximum(jnp.sum(m), 1.0))
    return rec + alpha * inv, rec, inv


# ----------------------------------- main ------------------------------------ #
if __name__ == "__main__":
    key = jax.random.PRNGKey(0)
    alpha = 0.5
    ok = True

    # (N, C, D, dtype, max_rows, use_float_mask)
    #  - aligned + ragged N, single full-height block and multi-block tiling
    #    (exercises partial tail block + 2-core split), bf16 inputs, int8/f32 mask.
    cases = [
        (64, 32, 16, jnp.float32, MAX_ROW_TILE, False),
        (70, 32, 16, jnp.float32, MAX_ROW_TILE, False),
        (70, 32, 16, jnp.float32, 32, True),
        (70, 32, 16, jnp.bfloat16, 32, False),
    ]

    for (N, C, D, dtype, max_rows, use_float_mask) in cases:
        k1, k2, k3, k4, k5, key = jax.random.split(key, 6)
        embed = jax.random.normal(k1, (N, C), dtype=jnp.float32)
        dec = jax.random.normal(k2, (N, C), dtype=jnp.float32)
        rep_o = jax.random.normal(k3, (N, D), dtype=jnp.float32)
        rep_a = jax.nn.softmax(jax.random.normal(k4, (N, D), dtype=jnp.float32), axis=1)
        mask_b = jax.random.uniform(k5, (N,)) > 0.5
        mask = mask_b.astype(jnp.float32) if use_float_mask else mask_b
        num_features = C

        e, dc, ro, ra = (x.astype(dtype) for x in (embed, dec, rep_o, rep_a))
        e32, dc32, ro32, ra32 = (x.astype(jnp.float32) for x in (e, dc, ro, ra))

        for mode in ("mse", "ce", "ce2"):
            out = lagraph_loss(e, ro, dc, ra, mask, mode, alpha, num_features,
                               max_rows=max_rows)
            out = jax.block_until_ready(out)
            ref = _ref(e32, ro32, dc32, ra32, mask.astype(jnp.float32),
                       mode, alpha, num_features)
            for got, want in zip(out, ref):
                if not jnp.allclose(got, want, rtol=1e-4, atol=1e-5):
                    ok = False

    if ok:
        print("KERNEL_OK")
    else:
        print("KERNEL_MISMATCH")
</pallas_src>

<mosaic_0001>
module attributes {stable_mosaic.version = 11 : i64} {
  func.func @_mse_kernel(%arg0: i32, %arg1: i32, %arg2: memref<64x32xf32, #tpu.memory_space<vmem>>, %arg3: memref<64x32xf32, #tpu.memory_space<vmem>>, %arg4: memref<64x16xf32, #tpu.memory_space<vmem>>, %arg5: memref<64x16xf32, #tpu.memory_space<vmem>>, %arg6: memref<1x8x128xf32, #tpu.memory_space<vmem>>, %arg7: memref<1x8x128xf32, #tpu.memory_space<vmem>>, %arg8: memref<64x1xf32, #tpu.memory_space<vmem>>, %arg9: memref<64x1xf32, #tpu.memory_space<vmem>>) attributes {dimension_semantics = [#tpu.dimension_semantics<parallel>, #tpu.dimension_semantics<arbitrary>], iteration_bounds = array<i64: 1, 1>, scalar_prefetch = 0 : i64, scratch_operands = 2 : i64, tpu.core_type = #tpu.core_type<tc>, window_params = [{transform_indices = @transform_0, window_bounds = array<i64: 64, 32>}, {transform_indices = @transform_1, window_bounds = array<i64: 64, 32>}, {transform_indices = @transform_2, window_bounds = array<i64: 64, 16>}, {transform_indices = @transform_3, window_bounds = array<i64: 64, 16>}, {transform_indices = @transform_4, window_bounds = array<i64: 1, 8, 128>}, {transform_indices = @transform_5, window_bounds = array<i64: 1, 8, 128>}]} {
    %c0_i32 = arith.constant 0 : i32
    %0 = arith.cmpi eq, %arg1, %c0_i32 : i32
    %1 = arith.extui %0 : i1 to i32
    %c0_i32_0 = arith.constant 0 : i32
    %2 = arith.cmpi ne, %1, %c0_i32_0 : i32
    scf.if %2 {
      %cst_22 = arith.constant 0.000000e+00 : f32
      %40 = vector.broadcast %cst_22 : f32 to vector<64x1xf32>
      %c0_23 = arith.constant 0 : index
      %c0_24 = arith.constant 0 : index
      %41 = vector.load %arg8[%c0_23, %c0_24] : memref<64x1xf32, #tpu.memory_space<vmem>>, vector<64x1xf32>
      tpu.vector_store %arg8[%c0_23, %c0_24], %40 {strides = array<i32>} : memref<64x1xf32, #tpu.memory_space<vmem>>, vector<64x1xf32>,
      %cst_25 = arith.constant 0.000000e+00 : f32
      %42 = vector.broadcast %cst_25 : f32 to vector<64x1xf32>
      %c0_26 = arith.constant 0 : index
      %c0_27 = arith.constant 0 : index
      %43 = vector.load %arg9[%c0_26, %c0_27] : memref<64x1xf32, #tpu.memory_space<vmem>>, vector<64x1xf32>
      tpu.vector_store %arg9[%c0_26, %c0_27], %42 {strides = array<i32>} : memref<64x1xf32, #tpu.memory_space<vmem>>, vector<64x1xf32>,
    } else {
    }
    %c1_i32 = arith.constant 1 : i32
    %3 = arith.muli %arg0, %c1_i32 : i32
    %4 = arith.addi %3, %arg1 : i32
    %c64_i32 = arith.constant 64 : i32
    %5 = arith.muli %4, %c64_i32 : i32
    %6 = tpu.iota {dimensions = array<i32: 0>} : vector<64x1xi32>
    %7 = vector.broadcast %5 : i32 to vector<64x1xi32>
    %8 = arith.addi %6, %7 : vector<64x1xi32>
    %c64_i32_1 = arith.constant 64 : i32
    %9 = vector.broadcast %c64_i32_1 : i32 to vector<64x1xi32>
    %10 = arith.cmpi slt, %8, %9 : vector<64x1xi32>
    %c0 = arith.constant 0 : index
    %c0_2 = arith.constant 0 : index
    %11 = vector.load %arg8[%c0, %c0_2] : memref<64x1xf32, #tpu.memory_space<vmem>>, vector<64x1xf32>
    %c0_3 = arith.constant 0 : index
    %c0_4 = arith.constant 0 : index
    %12 = vector.load %arg2[%c0_3, %c0_4] : memref<64x32xf32, #tpu.memory_space<vmem>>, vector<64x32xf32>
    %c0_5 = arith.constant 0 : index
    %c0_6 = arith.constant 0 : index
    %13 = vector.load %arg3[%c0_5, %c0_6] : memref<64x32xf32, #tpu.memory_space<vmem>>, vector<64x32xf32>
    %14 = arith.subf %12, %13 : vector<64x32xf32>
    %15 = arith.mulf %14, %14 : vector<64x32xf32>
    %cst = arith.constant 0.000000e+00 : f32
    %16 = vector.shape_cast %10 : vector<64x1xi1> to vector<64x1xi1>
    %17 = vector.broadcast %16 : vector<64x1xi1> to vector<64x32xi1>
    %18 = vector.broadcast %cst : f32 to vector<64x32xf32>
    %19 = arith.select %17, %15, %18 : vector<64x32xi1>, vector<64x32xf32>
    %cst_7 = arith.constant dense<0.000000e+00> : vector<64xf32>
    %20 = vector.multi_reduction <add>, %19, %cst_7 [1] : vector<64x32xf32> to vector<64xf32>
    %21 = vector.shape_cast %20 : vector<64xf32> to vector<64x1xf32>
    %22 = arith.addf %11, %21 : vector<64x1xf32>
    %c0_8 = arith.constant 0 : index
    %c0_9 = arith.constant 0 : index
    %23 = vector.load %arg8[%c0_8, %c0_9] : memref<64x1xf32, #tpu.memory_space<vmem>>, vector<64x1xf32>
    tpu.vector_store %arg8[%c0_8, %c0_9], %22 {strides = array<i32>} : memref<64x1xf32, #tpu.memory_space<vmem>>, vector<64x1xf32>,
    %c0_10 = arith.constant 0 : index
    %c0_11 = arith.constant 0 : index
    %24 = vector.load %arg9[%c0_10, %c0_11] : memref<64x1xf32, #tpu.memory_space<vmem>>, vector<64x1xf32>
    %c0_12 = arith.constant 0 : index
    %c0_13 = arith.constant 0 : index
    %25 = vector.load %arg4[%c0_12, %c0_13] : memref<64x16xf32, #tpu.memory_space<vmem>>, vector<64x16xf32>
    %c0_14 = arith.constant 0 : index
    %c0_15 = arith.constant 0 : index
    %26 = vector.load %arg5[%c0_14, %c0_15] : memref<64x16xf32, #tpu.memory_space<vmem>>, vector<64x16xf32>
    %27 = arith.subf %25, %26 : vector<64x16xf32>
    %28 = arith.mulf %27, %27 : vector<64x16xf32>
    %cst_16 = arith.constant 0.000000e+00 : f32
    %29 = vector.shape_cast %10 : vector<64x1xi1> to vector<64x1xi1>
    %30 = vector.broadcast %29 : vector<64x1xi1> to vector<64x16xi1>
    %31 = vector.broadcast %cst_16 : f32 to vector<64x16xf32>
    %32 = arith.select %30, %28, %31 : vector<64x16xi1>, vector<64x16xf32>
    %cst_17 = arith.constant dense<0.000000e+00> : vector<64xf32>
    %33 = vector.multi_reduction <add>, %32, %cst_17 [1] : vector<64x16xf32> to vector<64xf32>
    %34 = vector.shape_cast %33 : vector<64xf32> to vector<64x1xf32>
    %35 = arith.addf %24, %34 : vector<64x1xf32>
    %c0_18 = arith.constant 0 : index
    %c0_19 = arith.constant 0 : index
    %36 = vector.load %arg9[%c0_18, %c0_19] : memref<64x1xf32, #tpu.memory_space<vmem>>, vector<64x1xf32>
    tpu.vector_store %arg9[%c0_18, %c0_19], %35 {strides = array<i32>} : memref<64x1xf32, #tpu.memory_space<vmem>>, vector<64x1xf32>,
    %c0_i32_20 = arith.constant 0 : i32
    %37 = arith.cmpi eq, %arg1, %c0_i32_20 : i32
    %38 = arith.extui %37 : i1 to i32
    %c0_i32_21 = arith.constant 0 : i32
    %39 = arith.cmpi ne, %38, %c0_i32_21 : i32
    scf.if %39 {
      %c0_22 = arith.constant 0 : index
      %c0_23 = arith.constant 0 : index
      %40 = vector.load %arg8[%c0_22, %c0_23] : memref<64x1xf32, #tpu.memory_space<vmem>>, vector<64x1xf32>
      %41 = vector.shape_cast %40 : vector<64x1xf32> to vector<1x64x1xf32>
      %cst_24 = arith.constant dense<0.000000e+00> : vector<1xf32>
      %42 = vector.multi_reduction <add>, %41, %cst_24 [1, 2] : vector<1x64x1xf32> to vector<1xf32>
      %43 = vector.shape_cast %42 : vector<1xf32> to vector<1x1x1xf32>
      %44 = vector.extract %43[0, 0, 0] : f32 from vector<1x1x1xf32>
      %45 = vector.broadcast %44 : f32 to vector<1x8x128xf32>
      %c0_25 = arith.constant 0 : index
      %c0_26 = arith.constant 0 : index
      %c0_27 = arith.constant 0 : index
      %46 = vector.load %arg6[%c0_25, %c0_26, %c0_27] : memref<1x8x128xf32, #tpu.memory_space<vmem>>, vector<1x8x128xf32>
      tpu.vector_store %arg6[%c0_25, %c0_26, %c0_27], %45 {strides = array<i32>} : memref<1x8x128xf32, #tpu.memory_space<vmem>>, vector<1x8x128xf32>,
      %c0_28 = arith.constant 0 : index
      %c0_29 = arith.constant 0 : index
      %47 = vector.load %arg9[%c0_28, %c0_29] : memref<64x1xf32, #tpu.memory_space<vmem>>, vector<64x1xf32>
      %48 = vector.shape_cast %47 : vector<64x1xf32> to vector<1x64x1xf32>
      %cst_30 = arith.constant dense<0.000000e+00> : vector<1xf32>
      %49 = vector.multi_reduction <add>, %48, %cst_30 [1, 2] : vector<1x64x1xf32> to vector<1xf32>
      %50 = vector.shape_cast %49 : vector<1xf32> to vector<1x1x1xf32>
      %51 = vector.extract %50[0, 0, 0] : f32 from vector<1x1x1xf32>
      %52 = vector.broadcast %51 : f32 to vector<1x8x128xf32>
      %c0_31 = arith.constant 0 : index
      %c0_32 = arith.constant 0 : index
      %c0_33 = arith.constant 0 : index
      %53 = vector.load %arg7[%c0_31, %c0_32, %c0_33] : memref<1x8x128xf32, #tpu.memory_space<vmem>>, vector<1x8x128xf32>
      tpu.vector_store %arg7[%c0_31, %c0_32, %c0_33], %52 {strides = array<i32>} : memref<1x8x128xf32, #tpu.memory_space<vmem>>, vector<1x8x128xf32>,
    } else {
    }
    return
  }
  func.func @transform_0(%arg0: i32, %arg1: i32) -> (i32, i32) {
    %c1_i32 = arith.constant 1 : i32
    %0 = arith.muli %arg0, %c1_i32 : i32
    %1 = arith.addi %0, %arg1 : i32
    %c0_i32 = arith.constant 0 : i32
    %2 = arith.minsi %1, %c0_i32 : i32
    %c0_i32_0 = arith.constant 0 : i32
    %c0_i32_1 = arith.constant 0 : i32
    return %2, %c0_i32_0 : i32, i32
  }
  func.func @transform_1(%arg0: i32, %arg1: i32) -> (i32, i32) {
    %c1_i32 = arith.constant 1 : i32
    %0 = arith.muli %arg0, %c1_i32 : i32
    %1 = arith.addi %0, %arg1 : i32
    %c0_i32 = arith.constant 0 : i32
    %2 = arith.minsi %1, %c0_i32 : i32
    %c0_i32_0 = arith.constant 0 : i32
    %c0_i32_1 = arith.constant 0 : i32
    return %2, %c0_i32_0 : i32, i32
  }
  func.func @transform_2(%arg0: i32, %arg1: i32) -> (i32, i32) {
    %c1_i32 = arith.constant 1 : i32
    %0 = arith.muli %arg0, %c1_i32 : i32
    %1 = arith.addi %0, %arg1 : i32
    %c0_i32 = arith.constant 0 : i32
    %2 = arith.minsi %1, %c0_i32 : i32
    %c0_i32_0 = arith.constant 0 : i32
    %c0_i32_1 = arith.constant 0 : i32
    return %2, %c0_i32_0 : i32, i32
  }
  func.func @transform_3(%arg0: i32, %arg1: i32) -> (i32, i32) {
    %c1_i32 = arith.constant 1 : i32
    %0 = arith.muli %arg0, %c1_i32 : i32
    %1 = arith.addi %0, %arg1 : i32
    %c0_i32 = arith.constant 0 : i32
    %2 = arith.minsi %1, %c0_i32 : i32
    %c0_i32_0 = arith.constant 0 : i32
    %c0_i32_1 = arith.constant 0 : i32
    return %2, %c0_i32_0 : i32, i32
  }
  func.func @transform_4(%arg0: i32, %arg1: i32) -> (i32, i32, i32) {
    %c0_i32 = arith.constant 0 : i32
    %c0_i32_0 = arith.constant 0 : i32
    %c0_i32_1 = arith.constant 0 : i32
    return %arg0, %c0_i32, %c0_i32_0 : i32, i32, i32
  }
  func.func @transform_5(%arg0: i32, %arg1: i32) -> (i32, i32, i32) {
    %c0_i32 = arith.constant 0 : i32
    %c0_i32_0 = arith.constant 0 : i32
    %c0_i32_1 = arith.constant 0 : i32
    return %arg0, %c0_i32, %c0_i32_0 : i32, i32, i32
  }
}

</mosaic_0001>

<llo_original>
// kernel: tpu_custom_call.1
$region0: #{tpu_custom_call.1}
  #allocation0 [shape = 'u32[]', space=smem, size = 0x4, offset = 0x4, fixed_abs, tag = 'smem constant byte address 0x4 - core index']
  #allocation1 [shape = 'u32[144,128]{1,0:T(1,128)}', space=vmem, size = 0x12000, scoped, tag = 'internal scratch']
  #allocation2 [shape = 'f32[64,1]{1,0:T(8,128)}', space=vmem, size = 0x8000, scoped, tag = 'scratch operand']
  #allocation3 [shape = 'f32[64,1]{1,0:T(8,128)}', space=vmem, size = 0x8000, scoped, tag = 'scratch operand']
  %s0 = inlined_call_operand.hbm [shape: f32[64,32], index: 0, kind: input, shape index: {}]
  %s1 = inlined_call_operand.hbm [shape: f32[64,32], index: 1, kind: input, shape index: {}]
  %s2 = inlined_call_operand.hbm [shape: f32[64,16], index: 2, kind: input, shape index: {}]
  %s3 = inlined_call_operand.hbm [shape: f32[64,16], index: 3, kind: input, shape index: {}]
  %s4 = inlined_call_operand.hbm [shape: f32[1,8,128], index: 4, kind: output, shape index: {0}]
  %s5 = inlined_call_operand.hbm [shape: f32[1,8,128], index: 5, kind: output, shape index: {1}]
  %6 = xla_tuple %s4, %s5
  %s7 = sld [smem:[#allocation0]]
  $region58: #{tpu_custom_call.1} parent=0
    _
  %s9 = ssub.s32 1, %s7
  %s10 = scalar_select 0, %s9, %s7
  $region1: #{tpu_custom_call.1} parent=0
    #allocation4 [shape = 'u8[32768]{0}', space=vmem, size = 0x8000, scoped, tag = 'input window, operand 0, single buffered']
    #allocation5 [shape = 's32[1]{0}', space=sflag, size = 0x4, scoped, tag = 'scoped memory for tpu_custom_call.1']
    #allocation6 [shape = 's32[1]{0}', space=sflag, size = 0x4, scoped, tag = 'scoped memory for tpu_custom_call.1']
    #allocation7 [shape = 'u8[32768]{0}', space=vmem, size = 0x8000, scoped, tag = 'input window, operand 1, single buffered']
    #allocation8 [shape = 's32[1]{0}', space=sflag, size = 0x4, scoped, tag = 'scoped memory for tpu_custom_call.1']
    #allocation9 [shape = 'u8[32768]{0}', space=vmem, size = 0x8000, scoped, tag = 'input window, operand 2, single buffered']
    #allocation10 [shape = 'u8[32768]{0}', space=vmem, size = 0x8000, scoped, tag = 'input window, operand 3, single buffered']
    #allocation11 [shape = 's32[1]{0}', space=sflag, size = 0x4, scoped, tag = 'scoped memory for tpu_custom_call.1']
    #allocation12 [shape = 'u8[4096]{0}', space=vmem, size = 0x1000, scoped, tag = 'output window, operand 0, single buffered']
    #allocation13 [shape = 'u8[4096]{0}', space=vmem, size = 0x1000, scoped, tag = 'output window, operand 1, single buffered']
    #allocation14 [shape = 's32[1]{0}', space=sflag, size = 0x4, scoped, tag = 'scoped memory for tpu_custom_call.1']
    %11 = vsyncpa [#allocation5], 0
    %12 = vsyncpa [#allocation8], 0
    %13 = vsyncpa [#allocation11], 0
    %14 = vsyncpa [#allocation6], 0
    %15 = vsyncpa [#allocation14], 0
    // Predicated region
    $region2: #{tpu_custom_call.1} parent=1 // pred_check
      _
    $region3: #{tpu_custom_call.1} parent=1 // pred_check_branch
      %17 = sbr.rel (0) target = $region5
    $region4: #{tpu_custom_call.1} parent=1 // pred_region
      %s18 = sadd.s32 0, 0
      %p19 = scmp.lt.s32.totalorder %s18, 0
      %s20 = scalar_select %p19, %s18, 0
      %s21 = smul.u32 8, %s20
      %s23 = ssub.s32 1024, 1024
      %24 = vsyncadd [#allocation5], %s23
      %s25 = smul.addr %s21, 128
      %s26 = scalar_lea.hbm %s0, %s25
      %s27 = sshll.u32 [#allocation4], 4
      %s28 = int_to_ptr.vmem [resolvable:$true] %s27
      %33 = dma.hbm_to_vmem [thread:$0]  %s26, 1024, %s28, [#allocation5], 128, 128, 8
    $region5: #{tpu_custom_call.1} parent=1 // pred_fallthru
      _
    // Predicated region
    $region6: #{tpu_custom_call.1} parent=1 // pred_check
      _
    $region7: #{tpu_custom_call.1} parent=1 // pred_check_branch
      %35 = sbr.rel (0) target = $region9
    $region8: #{tpu_custom_call.1} parent=1 // pred_region
      %s36 = sadd.s32 0, 0
      %p37 = scmp.lt.s32.totalorder %s36, 0
      %s38 = scalar_select %p37, %s36, 0
      %s39 = smul.u32 8, %s38
      %s41 = ssub.s32 1024, 1024
      %42 = vsyncadd [#allocation8], %s41
      %s43 = smul.addr %s39, 128
      %s44 = scalar_lea.hbm %s1, %s43
      %s45 = sshll.u32 [#allocation7], 4
      %s46 = int_to_ptr.vmem [resolvable:$true] %s45
      %51 = dma.hbm_to_vmem [thread:$0]  %s44, 1024, %s46, [#allocation8], 128, 128, 8
    $region9: #{tpu_custom_call.1} parent=1 // pred_fallthru
      _
    // Predicated region
    $region10: #{tpu_custom_call.1} parent=1 // pred_check
      _
    $region11: #{tpu_custom_call.1} parent=1 // pred_check_branch
      %53 = sbr.rel (0) target = $region13
    $region12: #{tpu_custom_call.1} parent=1 // pred_region
      %s54 = sadd.s32 0, 0
      %p55 = scmp.lt.s32.totalorder %s54, 0
      %s56 = scalar_select %p55, %s54, 0
      %s57 = smul.u32 8, %s56
      %s59 = ssub.s32 1024, 1024
      %60 = vsyncadd [#allocation8], %s59
      %s61 = smul.addr %s57, 128
      %s62 = scalar_lea.hbm %s2, %s61
      %s63 = sshll.u32 [#allocation9], 4
      %s64 = int_to_ptr.vmem [resolvable:$true] %s63
      %69 = dma.hbm_to_vmem [thread:$0]  %s62, 1024, %s64, [#allocation8], 128, 128, 8
    $region13: #{tpu_custom_call.1} parent=1 // pred_fallthru
      _
    // Predicated region
    $region14: #{tpu_custom_call.1} parent=1 // pred_check
      _
    $region15: #{tpu_custom_call.1} parent=1 // pred_check_branch
      %71 = sbr.rel (0) target = $region17
    $region16: #{tpu_custom_call.1} parent=1 // pred_region
      %s72 = sadd.s32 0, 0
      %p73 = scmp.lt.s32.totalorder %s72, 0
      %s74 = scalar_select %p73, %s72, 0
      %s75 = smul.u32 8, %s74
      %s77 = ssub.s32 1024, 1024
      %78 = vsyncadd [#allocation11], %s77
      %s79 = smul.addr %s75, 128
      %s80 = scalar_lea.hbm %s3, %s79
      %s81 = sshll.u32 [#allocation10], 4
      %s82 = int_to_ptr.vmem [resolvable:$true] %s81
      %87 = dma.hbm_to_vmem [thread:$0]  %s80, 1024, %s82, [#allocation11], 128, 128, 8
    $region17: #{tpu_custom_call.1} parent=1 // pred_fallthru
      _
    // Predicated region
    $region18: #{tpu_custom_call.1} parent=1 // pred_check
      _
    $region19: #{tpu_custom_call.1} parent=1 // pred_check_branch
      %89 = sbr.rel (0) target = $region21
    $region20: #{tpu_custom_call.1} parent=1 // pred_region
      %90 = dma.done [#allocation5], 1024
    $region21: #{tpu_custom_call.1} parent=1 // pred_fallthru
      _
    // Predicated region
    $region22: #{tpu_custom_call.1} parent=1 // pred_check
      _
    $region23: #{tpu_custom_call.1} parent=1 // pred_check_branch
      %92 = sbr.rel (0) target = $region25
    $region24: #{tpu_custom_call.1} parent=1 // pred_region
      %93 = dma.done [#allocation8], 1024
    $region25: #{tpu_custom_call.1} parent=1 // pred_fallthru
      _
    // Predicated region
    $region26: #{tpu_custom_call.1} parent=1 // pred_check
      _
    $region27: #{tpu_custom_call.1} parent=1 // pred_check_branch
      %95 = sbr.rel (0) target = $region29
    $region28: #{tpu_custom_call.1} parent=1 // pred_region
      %96 = dma.done [#allocation8], 1024
    $region29: #{tpu_custom_call.1} parent=1 // pred_fallthru
      _
    // Predicated region
    $region30: #{tpu_custom_call.1} parent=1 // pred_check
      _
    $region31: #{tpu_custom_call.1} parent=1 // pred_check_branch
      %98 = sbr.rel (0) target = $region33
    $region32: #{tpu_custom_call.1} parent=1 // pred_region
      %99 = dma.done [#allocation11], 1024
    $region33: #{tpu_custom_call.1} parent=1 // pred_fallthru
      _
    %s100 = sadd.s32 0, 0
    %p101 = scmp.lt.s32.totalorder %s100, 0
    %s102 = scalar_select %p101, %s100, 0
    %s103 = smul.u32 8, %s102
    %s104 = sadd.s32 0, 0
    %p105 = scmp.lt.s32.totalorder %s104, 0
    %s106 = scalar_select %p105, %s104, 0
    %s107 = smul.u32 8, %s106
    %s108 = sadd.s32 0, 0
    %p109 = scmp.lt.s32.totalorder %s108, 0
    %s110 = scalar_select %p109, %s108, 0
    %s111 = smul.u32 8, %s110
    %s112 = sadd.s32 0, 0
    %p113 = scmp.lt.s32.totalorder %s112, 0
    %s114 = scalar_select %p113, %s112, 0
    %s115 = smul.u32 8, %s114
    %p116 = scmp.eq.s32.totalorder 0, 0
    // Predicated region
    $region34: #{tpu_custom_call.1} parent=1 // pred_check
      %p117 = pneg %p116
    $region35: #{tpu_custom_call.1} parent=1 // pred_check_branch
      %119 = sbr.rel (%p117) target = $region37
    $region36: #{tpu_custom_call.1} parent=1 // pred_region
      %vm120 = vcmask 7168
      %121 = vst.msk [vmem:[#allocation2] sm:$0xff] %vm120, 0.0
      %122 = vst.msk [vmem:[#allocation2 + $0x8] sm:$0xff] %vm120, 0.0
      %123 = vst.msk [vmem:[#allocation2 + $0x10] sm:$0xff] %vm120, 0.0
      %124 = vst.msk [vmem:[#allocation2 + $0x18] sm:$0xff] %vm120, 0.0
      %125 = vst.msk [vmem:[#allocation2 + $0x20] sm:$0xff] %vm120, 0.0
      %126 = vst.msk [vmem:[#allocation2 + $0x28] sm:$0xff] %vm120, 0.0
      %127 = vst.msk [vmem:[#allocation2 + $0x30] sm:$0xff] %vm120, 0.0
      %128 = vst.msk [vmem:[#allocation2 + $0x38] sm:$0xff] %vm120, 0.0
      %129 = vst.msk [vmem:[#allocation3] sm:$0xff] %vm120, 0.0
      %130 = vst.msk [vmem:[#allocation3 + $0x8] sm:$0xff] %vm120, 0.0
      %131 = vst.msk [vmem:[#allocation3 + $0x10] sm:$0xff] %vm120, 0.0
      %132 = vst.msk [vmem:[#allocation3 + $0x18] sm:$0xff] %vm120, 0.0
      %133 = vst.msk [vmem:[#allocation3 + $0x20] sm:$0xff] %vm120, 0.0
      %134 = vst.msk [vmem:[#allocation3 + $0x28] sm:$0xff] %vm120, 0.0
      %135 = vst.msk [vmem:[#allocation3 + $0x30] sm:$0xff] %vm120, 0.0
      %136 = vst.msk [vmem:[#allocation3 + $0x38] sm:$0xff] %vm120, 0.0
    $region37: #{tpu_custom_call.1} parent=1 // pred_fallthru
      _
    %s137 = sadd.s32 0, 0
    %s138 = smul.u32 %s137, 64
    %v139 = vlaneseq
    %v140 = vshrl.u32 %v139, 7
    %v141 = vadd.s32 %v140, 8
    %v142 = vadd.s32 %v140, 16
    %v143 = vadd.s32 %v140, 24
    %v144 = vadd.s32 %v140, 32
    %v145 = vadd.s32 %v140, 40
    %v146 = vadd.s32 %v140, 48
    %v147 = vadd.s32 %v140, 56
    %v148 = vstv %s138
    %v149 = vadd.s32 %v140, %v148
    %v150 = vadd.s32 %v141, %v148
    %v151 = vadd.s32 %v142, %v148
    %v152 = vadd.s32 %v143, %v148
    %v153 = vadd.s32 %v144, %v148
    %v154 = vadd.s32 %v145, %v148
    %v155 = vadd.s32 %v146, %v148
    %v156 = vadd.s32 %v147, %v148
    %vm157 = vcmp.lt.s32.totalorder %v149, 64
    %vm158 = vcmp.lt.s32.totalorder %v150, 64
    %vm159 = vcmp.lt.s32.totalorder %v151, 64
    %vm160 = vcmp.lt.s32.totalorder %v152, 64
    %vm161 = vcmp.lt.s32.totalorder %v153, 64
    %vm162 = vcmp.lt.s32.totalorder %v154, 64
    %vm163 = vcmp.lt.s32.totalorder %v155, 64
    %vm164 = vcmp.lt.s32.totalorder %v156, 64
    %v165 = vld [vmem:[#allocation2] sm:$0xff]
    %v166 = vld [vmem:[#allocation2 + $0x8] sm:$0xff]
    %v167 = vld [vmem:[#allocation2 + $0x10] sm:$0xff]
    %v168 = vld [vmem:[#allocation2 + $0x18] sm:$0xff]
    %v169 = vld [vmem:[#allocation2 + $0x20] sm:$0xff]
    %v170 = vld [vmem:[#allocation2 + $0x28] sm:$0xff]
    %v171 = vld [vmem:[#allocation2 + $0x30] sm:$0xff]
    %v172 = vld [vmem:[#allocation2 + $0x38] sm:$0xff]
    %v173 = vld [vmem:[#allocation4] sm:$0xff]
    %v174 = vld [vmem:[#allocation4 + $0x8] sm:$0xff]
    %v175 = vld [vmem:[#allocation4 + $0x10] sm:$0xff]
    %v176 = vld [vmem:[#allocation4 + $0x18] sm:$0xff]
    %v177 = vld [vmem:[#allocation4 + $0x20] sm:$0xff]
    %v178 = vld [vmem:[#allocation4 + $0x28] sm:$0xff]
    %v179 = vld [vmem:[#allocation4 + $0x30] sm:$0xff]
    %v180 = vld [vmem:[#allocation4 + $0x38] sm:$0xff]
    %v181 = vld [vmem:[#allocation7] sm:$0xff]
    %v182 = vld [vmem:[#allocation7 + $0x8] sm:$0xff]
    %v183 = vld [vmem:[#allocation7 + $0x10] sm:$0xff]
    %v184 = vld [vmem:[#allocation7 + $0x18] sm:$0xff]
    %v185 = vld [vmem:[#allocation7 + $0x20] sm:$0xff]
    %v186 = vld [vmem:[#allocation7 + $0x28] sm:$0xff]
    %v187 = vld [vmem:[#allocation7 + $0x30] sm:$0xff]
    %v188 = vld [vmem:[#allocation7 + $0x38] sm:$0xff]
    %v189 = vsub.f32 %v173, %v181
    %v190 = vsub.f32 %v174, %v182
    %v191 = vsub.f32 %v175, %v183
    %v192 = vsub.f32 %v176, %v184
    %v193 = vsub.f32 %v177, %v185
    %v194 = vsub.f32 %v178, %v186
    %v195 = vsub.f32 %v179, %v187
    %v196 = vsub.f32 %v180, %v188
    %v197 = vmul.f32 %v189, %v189
    %v198 = vmul.f32 %v190, %v190
    %v199 = vmul.f32 %v191, %v191
    %v200 = vmul.f32 %v192, %v192
    %v201 = vmul.f32 %v193, %v193
    %v202 = vmul.f32 %v194, %v194
    %v203 = vmul.f32 %v195, %v195
    %v204 = vmul.f32 %v196, %v196
    %v205 = vsel %vm157, 1, 0
    %v206 = vsel %vm158, 1, 0
    %v207 = vsel %vm159, 1, 0
    %v208 = vsel %vm160, 1, 0
    %v209 = vsel %vm161, 1, 0
    %v210 = vsel %vm162, 1, 0
    %v211 = vsel %vm163, 1, 0
    %v212 = vsel %vm164, 1, 0
    %vm213 = vcmp.eq.s32.totalorder %v205, 1
    %vm214 = vcmp.eq.s32.totalorder %v206, 1
    %vm215 = vcmp.eq.s32.totalorder %v207, 1
    %vm216 = vcmp.eq.s32.totalorder %v208, 1
    %vm217 = vcmp.eq.s32.totalorder %v209, 1
    %vm218 = vcmp.eq.s32.totalorder %v210, 1
    %vm219 = vcmp.eq.s32.totalorder %v211, 1
    %vm220 = vcmp.eq.s32.totalorder %v212, 1
    %v221 = vsel %vm213, %v197, 0.0
    %v222 = vsel %vm214, %v198, 0.0
    %v223 = vsel %vm215, %v199, 0.0
    %v224 = vsel %vm216, %v200, 0.0
    %v225 = vsel %vm217, %v201, 0.0
    %v226 = vsel %vm218, %v202, 0.0
    %v227 = vsel %vm219, %v203, 0.0
    %v228 = vsel %vm220, %v204, 0.0
    %vm229 = vcmask 261120
    %v230 = vsel %vm229, %v221, 0.0
    %231 = vadd.xlane.f32.xlu0 %v230
    %v232 = vpop.xlane.xlu0 %231
    %v233 = vsel %vm229, %v222, 0.0
    %234 = vadd.xlane.f32.xlu0 %v233
    %v235 = vpop.xlane.xlu0 %234
    %v236 = vsel %vm229, %v223, 0.0
    %237 = vadd.xlane.f32.xlu0 %v236
    %v238 = vpop.xlane.xlu0 %237
    %v239 = vsel %vm229, %v224, 0.0
    %240 = vadd.xlane.f32.xlu0 %v239
    %v241 = vpop.xlane.xlu0 %240
    %v242 = vsel %vm229, %v225, 0.0
    %243 = vadd.xlane.f32.xlu0 %v242
    %v244 = vpop.xlane.xlu0 %243
    %v245 = vsel %vm229, %v226, 0.0
    %246 = vadd.xlane.f32.xlu0 %v245
    %v247 = vpop.xlane.xlu0 %246
    %v248 = vsel %vm229, %v227, 0.0
    %249 = vadd.xlane.f32.xlu0 %v248
    %v250 = vpop.xlane.xlu0 %249
    %v251 = vsel %vm229, %v228, 0.0
    %252 = vadd.xlane.f32.xlu0 %v251
    %v253 = vpop.xlane.xlu0 %252
    %v254 = vadd.f32 %v165, %v232
    %v255 = vadd.f32 %v166, %v235
    %v256 = vadd.f32 %v167, %v238
    %v257 = vadd.f32 %v168, %v241
    %v258 = vadd.f32 %v169, %v244
    %v259 = vadd.f32 %v170, %v247
    %v260 = vadd.f32 %v171, %v250
    %v261 = vadd.f32 %v172, %v253
    %vm262 = vcmask 7168
    %263 = vst.msk [vmem:[#allocation2] sm:$0xff] %vm262, %v254
    %264 = vst.msk [vmem:[#allocation2 + $0x8] sm:$0xff] %vm262, %v255
    %265 = vst.msk [vmem:[#allocation2 + $0x10] sm:$0xff] %vm262, %v256
    %266 = vst.msk [vmem:[#allocation2 + $0x18] sm:$0xff] %vm262, %v257
    %267 = vst.msk [vmem:[#allocation2 + $0x20] sm:$0xff] %vm262, %v258
    %268 = vst.msk [vmem:[#allocation2 + $0x28] sm:$0xff] %vm262, %v259
    %269 = vst.msk [vmem:[#allocation2 + $0x30] sm:$0xff] %vm262, %v260
    %270 = vst.msk [vmem:[#allocation2 + $0x38] sm:$0xff] %vm262, %v261
    %v271 = vld [vmem:[#allocation3] sm:$0xff]
    %v272 = vld [vmem:[#allocation3 + $0x8] sm:$0xff]
    %v273 = vld [vmem:[#allocation3 + $0x10] sm:$0xff]
    %v274 = vld [vmem:[#allocation3 + $0x18] sm:$0xff]
    %v275 = vld [vmem:[#allocation3 + $0x20] sm:$0xff]
    %v276 = vld [vmem:[#allocation3 + $0x28] sm:$0xff]
    %v277 = vld [vmem:[#allocation3 + $0x30] sm:$0xff]
    %v278 = vld [vmem:[#allocation3 + $0x38] sm:$0xff]
    %v279 = vld [vmem:[#allocation9] sm:$0xff]
    %v280 = vld [vmem:[#allocation9 + $0x8] sm:$0xff]
    %v281 = vld [vmem:[#allocation9 + $0x10] sm:$0xff]
    %v282 = vld [vmem:[#allocation9 + $0x18] sm:$0xff]
    %v283 = vld [vmem:[#allocation9 + $0x20] sm:$0xff]
    %v284 = vld [vmem:[#allocation9 + $0x28] sm:$0xff]
    %v285 = vld [vmem:[#allocation9 + $0x30] sm:$0xff]
    %v286 = vld [vmem:[#allocation9 + $0x38] sm:$0xff]
    %v287 = vld [vmem:[#allocation10] sm:$0xff]
    %v288 = vld [vmem:[#allocation10 + $0x8] sm:$0xff]
    %v289 = vld [vmem:[#allocation10 + $0x10] sm:$0xff]
    %v290 = vld [vmem:[#allocation10 + $0x18] sm:$0xff]
    %v291 = vld [vmem:[#allocation10 + $0x20] sm:$0xff]
    %v292 = vld [vmem:[#allocation10 + $0x28] sm:$0xff]
    %v293 = vld [vmem:[#allocation10 + $0x30] sm:$0xff]
    %v294 = vld [vmem:[#allocation10 + $0x38] sm:$0xff]
    %v295 = vsub.f32 %v279, %v287
    %v296 = vsub.f32 %v280, %v288
    %v297 = vsub.f32 %v281, %v289
    %v298 = vsub.f32 %v282, %v290
    %v299 = vsub.f32 %v283, %v291
    %v300 = vsub.f32 %v284, %v292
    %v301 = vsub.f32 %v285, %v293
    %v302 = vsub.f32 %v286, %v294
    %v303 = vmul.f32 %v295, %v295
    %v304 = vmul.f32 %v296, %v296
    %v305 = vmul.f32 %v297, %v297
    %v306 = vmul.f32 %v298, %v298
    %v307 = vmul.f32 %v299, %v299
    %v308 = vmul.f32 %v300, %v300
    %v309 = vmul.f32 %v301, %v301
    %v310 = vmul.f32 %v302, %v302
    %v311 = vsel %vm213, %v303, 0.0
    %v312 = vsel %vm214, %v304, 0.0
    %v313 = vsel %vm215, %v305, 0.0
    %v314 = vsel %vm216, %v306, 0.0
    %v315 = vsel %vm217, %v307, 0.0
    %v316 = vsel %vm218, %v308, 0.0
    %v317 = vsel %vm219, %v309, 0.0
    %v318 = vsel %vm220, %v310, 0.0
    %vm319 = vcmask 130048
    %v320 = vsel %vm319, %v311, 0.0
    %321 = vadd.xlane.f32.xlu0 %v320
    %v322 = vpop.xlane.xlu0 %321
    %v323 = vsel %vm319, %v312, 0.0
    %324 = vadd.xlane.f32.xlu0 %v323
    %v325 = vpop.xlane.xlu0 %324
    %v326 = vsel %vm319, %v313, 0.0
    %327 = vadd.xlane.f32.xlu0 %v326
    %v328 = vpop.xlane.xlu0 %327
    %v329 = vsel %vm319, %v314, 0.0
    %330 = vadd.xlane.f32.xlu0 %v329
    %v331 = vpop.xlane.xlu0 %330
    %v332 = vsel %vm319, %v315, 0.0
    %333 = vadd.xlane.f32.xlu0 %v332
    %v334 = vpop.xlane.xlu0 %333
    %v335 = vsel %vm319, %v316, 0.0
    %336 = vadd.xlane.f32.xlu0 %v335
    %v337 = vpop.xlane.xlu0 %336
    %v338 = vsel %vm319, %v317, 0.0
    %339 = vadd.xlane.f32.xlu0 %v338
    %v340 = vpop.xlane.xlu0 %339
    %v341 = vsel %vm319, %v318, 0.0
    %342 = vadd.xlane.f32.xlu0 %v341
    %v343 = vpop.xlane.xlu0 %342
    %v344 = vadd.f32 %v271, %v322
    %v345 = vadd.f32 %v272, %v325
    %v346 = vadd.f32 %v273, %v328
    %v347 = vadd.f32 %v274, %v331
    %v348 = vadd.f32 %v275, %v334
    %v349 = vadd.f32 %v276, %v337
    %v350 = vadd.f32 %v277, %v340
    %v351 = vadd.f32 %v278, %v343
    %352 = vst.msk [vmem:[#allocation3] sm:$0xff] %vm262, %v344
    %353 = vst.msk [vmem:[#allocation3 + $0x8] sm:$0xff] %vm262, %v345
    %354 = vst.msk [vmem:[#allocation3 + $0x10] sm:$0xff] %vm262, %v346
    %355 = vst.msk [vmem:[#allocation3 + $0x18] sm:$0xff] %vm262, %v347
    %356 = vst.msk [vmem:[#allocation3 + $0x20] sm:$0xff] %vm262, %v348
    %357 = vst.msk [vmem:[#allocation3 + $0x28] sm:$0xff] %vm262, %v349
    %358 = vst.msk [vmem:[#allocation3 + $0x30] sm:$0xff] %vm262, %v350
    %359 = vst.msk [vmem:[#allocation3 + $0x38] sm:$0xff] %vm262, %v351
    // Predicated region
    $region38: #{tpu_custom_call.1} parent=1 // pred_check
      %p360 = pneg %p116
    $region39: #{tpu_custom_call.1} parent=1 // pred_check_branch
      %362 = sbr.rel (%p360) target = $region41
    $region40: #{tpu_custom_call.1} parent=1 // pred_region
      %v363 = vld [vmem:[#allocation2] sm:$0xff]
      %v364 = vld [vmem:[#allocation2 + $0x8] sm:$0xff]
      %v365 = vld [vmem:[#allocation2 + $0x10] sm:$0xff]
      %v366 = vld [vmem:[#allocation2 + $0x18] sm:$0xff]
      %v367 = vld [vmem:[#allocation2 + $0x20] sm:$0xff]
      %v368 = vld [vmem:[#allocation2 + $0x28] sm:$0xff]
      %v369 = vld [vmem:[#allocation2 + $0x30] sm:$0xff]
      %v370 = vld [vmem:[#allocation2 + $0x38] sm:$0xff]
      %v371 = vsel %vm262, %v363, 0.0
      %v372 = vsel %vm262, %v364, 0.0
      %v373 = vadd.f32 %v371, %v372
      %v374 = vsel %vm262, %v365, 0.0
      %v375 = vadd.f32 %v373, %v374
      %v376 = vsel %vm262, %v366, 0.0
      %v377 = vadd.f32 %v375, %v376
      %v378 = vsel %vm262, %v367, 0.0
      %v379 = vadd.f32 %v377, %v378
      %v380 = vsel %vm262, %v368, 0.0
      %v381 = vadd.f32 %v379, %v380
      %v382 = vsel %vm262, %v369, 0.0
      %v383 = vadd.f32 %v381, %v382
      %v384 = vsel %vm262, %v370, 0.0
      %v385 = vadd.f32 %v383, %v384
      %386 = vadd.xlane.f32.xlu0 %v385
      %v387 = vpop.xlane.xlu0 %386
      %v388 = vrot.slane %v387, 4
      %v389 = vadd.f32 %v387, %v388
      %v390 = vrot.slane %v389, 2
      %v391 = vadd.f32 %v389, %v390
      %v392 = vrot.slane %v391, 1
      %v393 = vadd.f32 %v391, %v392
      %s394 = vtos %v393
      %v395 = vstv %s394
      %396 = vst [vmem:[#allocation12] sm:$0xff] %v395
      %v397 = vld [vmem:[#allocation3] sm:$0xff]
      %v398 = vld [vmem:[#allocation3 + $0x8] sm:$0xff]
      %v399 = vld [vmem:[#allocation3 + $0x10] sm:$0xff]
      %v400 = vld [vmem:[#allocation3 + $0x18] sm:$0xff]
      %v401 = vld [vmem:[#allocation3 + $0x20] sm:$0xff]
      %v402 = vld [vmem:[#allocation3 + $0x28] sm:$0xff]
      %v403 = vld [vmem:[#allocation3 + $0x30] sm:$0xff]
      %v404 = vld [vmem:[#allocation3 + $0x38] sm:$0xff]
      %v405 = vsel %vm262, %v397, 0.0
      %v406 = vsel %vm262, %v398, 0.0
      %v407 = vadd.f32 %v405, %v406
      %v408 = vsel %vm262, %v399, 0.0
      %v409 = vadd.f32 %v407, %v408
      %v410 = vsel %vm262, %v400, 0.0
      %v411 = vadd.f32 %v409, %v410
      %v412 = vsel %vm262, %v401, 0.0
      %v413 = vadd.f32 %v411, %v412
      %v414 = vsel %vm262, %v402, 0.0
      %v415 = vadd.f32 %v413, %v414
      %v416 = vsel %vm262, %v403, 0.0
      %v417 = vadd.f32 %v415, %v416
      %v418 = vsel %vm262, %v404, 0.0
      %v419 = vadd.f32 %v417, %v418
      %420 = vadd.xlane.f32.xlu0 %v419
      %v421 = vpop.xlane.xlu0 %420
      %v422 = vrot.slane %v421, 4
      %v423 = vadd.f32 %v421, %v422
      %v424 = vrot.slane %v423, 2
      %v425 = vadd.f32 %v423, %v424
      %v426 = vrot.slane %v425, 1
      %v427 = vadd.f32 %v425, %v426
      %s428 = vtos %v427
      %v429 = vstv %s428
      %430 = vst [vmem:[#allocation13] sm:$0xff] %v429
    $region41: #{tpu_custom_call.1} parent=1 // pred_fallthru
      _
    // Predicated region
    $region42: #{tpu_custom_call.1} parent=1 // pred_check
      _
    $region43: #{tpu_custom_call.1} parent=1 // pred_check_branch
      %432 = sbr.rel (0) target = $region45
    $region44: #{tpu_custom_call.1} parent=1 // pred_region
      %s434 = ssub.s32 128, 128
      %435 = vsyncadd [#allocation6], %s434
      %s437 = sshll.u32 [#allocation12], 4
      %s438 = int_to_ptr.vmem [resolvable:$true] %s437
      %440 = dma.vmem_to_hbm [thread:$0]  %s438, 128, %s4, [#allocation6]
    $region45: #{tpu_custom_call.1} parent=1 // pred_fallthru
      _
    // Predicated region
    $region46: #{tpu_custom_call.1} parent=1 // pred_check
      _
    $region47: #{tpu_custom_call.1} parent=1 // pred_check_branch
      %442 = sbr.rel (0) target = $region49
    $region48: #{tpu_custom_call.1} parent=1 // pred_region
      %s444 = ssub.s32 128, 128
      %445 = vsyncadd [#allocation14], %s444
      %s447 = sshll.u32 [#allocation13], 4
      %s448 = int_to_ptr.vmem [resolvable:$true] %s447
      %450 = dma.vmem_to_hbm [thread:$0]  %s448, 128, %s5, [#allocation14]
    $region49: #{tpu_custom_call.1} parent=1 // pred_fallthru
      _
    // Predicated region
    $region50: #{tpu_custom_call.1} parent=1 // pred_check
      _
    $region51: #{tpu_custom_call.1} parent=1 // pred_check_branch
      %452 = sbr.rel (0) target = $region53
    $region52: #{tpu_custom_call.1} parent=1 // pred_region
      %453 = dma.done [#allocation6], 128
    $region53: #{tpu_custom_call.1} parent=1 // pred_fallthru
      _
    // Predicated region
    $region54: #{tpu_custom_call.1} parent=1 // pred_check
      _
    $region55: #{tpu_custom_call.1} parent=1 // pred_check_branch
      %455 = sbr.rel (0) target = $region57
    $region56: #{tpu_custom_call.1} parent=1 // pred_region
      %456 = dma.done [#allocation14], 128
    $region57: #{tpu_custom_call.1} parent=1 // pred_fallthru
      _
    %457 = vsyncpa [#allocation5], 1
    %458 = vsyncpa [#allocation8], 1
    %459 = vsyncpa [#allocation11], 1
    %460 = vsyncpa [#allocation6], 1
    %461 = vsyncpa [#allocation14], 1

</llo_original>
